<compile_context>
chip_gen: v7x
topology: tpu7x:2x2x1
jax: 0.10.0
libtpu: 0.0.40
codegen_flags: <defaults>
</compile_context>

<pallas_src>
import functools

import numpy as np
import jax
import jax.numpy as jnp
from jax.experimental import pallas as pl
from jax.experimental.pallas import tpu as pltpu


def _round_up(x, m):
    return ((x + m - 1) // m) * m


def _mi3_kernel(mall_ref, rall_ref, wab_ref, waff_ref, sext_ref, o_ref, *, d0d1):
    """One batch tile: fused 2-path multiplicative interaction + final contraction."""
    f32 = jnp.float32
    cdt = wab_ref.dtype
    mall = mall_ref[...]                                                 # (tB, ktot)

    # One wide selection matmul: [m1rep | m2til | m3e_ext].  R_all is 0/1 so the
    # result is exact; slices land on 128-aligned lane offsets for these shapes.
    sel = jnp.dot(mall, rall_ref[...], preferred_element_type=f32)       # (tB, 2*d0d1+dcat)
    m1rep = sel[:, :d0d1]
    m2til = sel[:, d0d1:2 * d0d1]
    m3ext = sel[:, 2 * d0d1:]                                            # (tB, dcat)

    # z[b, n*d1+m] = m1[b,n] * m2[b,m]   (exact product in f32, then cast for the MXU)
    z = (m1rep * m2til).astype(cdt)                                      # (tB, d0*d1)

    # Fused bilinear + affine for BOTH paths (lane-concatenated weights).
    combined = (jnp.dot(z, wab_ref[...], preferred_element_type=f32) +
                jnp.dot(mall, waff_ref[...], preferred_element_type=f32))  # (tB, dcat)

    # final[b,q] = sum_p m3[b,p]*out_a[b,p,q] + out_b[b,q]
    # m3ext is [repeat(m3, do) | 1...1]; s_ext sums the p-blocks and passes out_b through.
    prod = (m3ext * combined).astype(cdt)
    o_ref[...] = jnp.dot(prod, sext_ref[...],
                         preferred_element_type=f32).astype(o_ref.dtype)


def mi3modal_forward(m1, m2, m3, params, *, batch_tile=1024,
                     compute_dtype=jnp.bfloat16):
    """Pallas-backed forward of MultiplicativeInteractions3Modal."""
    f32 = jnp.float32
    Wa, Ua, Va, ba = params["Wa"], params["Ua"], params["Va"], params["ba"]
    Wb, Ub, Vb, bb = params["Wb"], params["Ub"], params["Vb"], params["bb"]
    d0, d1, d2, do = Wa.shape
    B = m1.shape[0]
    d0d1, d2do = d0 * d1, d2 * do
    dcat = d2do + do                 # lane-concatenated width of [out_a | out_b]
    ktot = d0 + d1 + 1 + d2          # contraction dim of [m1 | m2 | 1 | m3]

    # ---- weight prep: lane-concat the two paths; affine + bias + zero(m3) rows ----
    wab = jnp.concatenate(
        [Wa.reshape(d0d1, d2do), Wb.reshape(d0d1, do)], axis=1)           # (d0*d1, dcat)
    waff = jnp.concatenate([
        jnp.concatenate([Ua.reshape(d0, d2do), Ub.reshape(d0, do)], axis=1),
        jnp.concatenate([Va.reshape(d1, d2do), Vb.reshape(d1, do)], axis=1),
        jnp.concatenate([ba.reshape(1, d2do), bb.reshape(1, do)], axis=1),
        jnp.zeros((d2, dcat), f32),          # m3 columns contribute nothing here
    ], axis=0)                                                            # (ktot, dcat)

    # ---- constant 0/1 selection matrices (numpy => trace-time constants) ----
    r_all = np.zeros((ktot, 2 * d0d1 + dcat), np.float32)
    # m1rep[n*d1+m] = m1[n]
    r_all[:d0, :d0d1] = np.kron(np.eye(d0, dtype=np.float32),
                                np.ones((1, d1), np.float32))
    # m2til[n*d1+m] = m2[m]
    r_all[d0:d0 + d1, d0d1:2 * d0d1] = np.kron(np.ones((1, d0), np.float32),
                                               np.eye(d1, dtype=np.float32))
    # m3e_ext[p*do+q] = m3[p]   (out_a lanes)
    r_all[d0 + d1 + 1:, 2 * d0d1:2 * d0d1 + d2do] = np.kron(
        np.eye(d2, dtype=np.float32), np.ones((1, do), np.float32))
    # m3e_ext[d2do + q] = 1     (out_b passthrough, sourced from the ones column)
    r_all[d0 + d1, 2 * d0d1 + d2do:] = 1.0
    # s_ext: sum the d2 out_a blocks + identity for the out_b lanes.
    s_ext = np.concatenate([
        np.kron(np.ones((d2, 1), np.float32), np.eye(do, dtype=np.float32)),
        np.eye(do, dtype=np.float32)], axis=0)                            # (dcat, do)

    wab = wab.astype(compute_dtype)
    waff = waff.astype(compute_dtype)
    r_all = jnp.asarray(r_all, dtype=compute_dtype)    # 0/1 => bit-exact in bf16
    s_ext = jnp.asarray(s_ext, dtype=compute_dtype)

    # ---- activations: single pipelined block [m1 | m2 | 1 | m3] ----
    m_all = jnp.concatenate(
        [m1.astype(f32), m2.astype(f32), jnp.ones((B, 1), f32), m3.astype(f32)],
        axis=1).astype(compute_dtype)                                     # (B, ktot)

    # ---- batch tiling: sublane-aligned; >=2 grid steps when possible (v7x megacore) ----
    bp0 = _round_up(B, 8)
    half = _round_up(-(-bp0 // 2), 8)
    tb = max(8, min(int(batch_tile), bp0, half))
    bp = _round_up(B, tb)
    if bp != B:
        m_all = jnp.pad(m_all, ((0, bp - B), (0, 0)))   # padded rows are all-zero
    grid = (bp // tb,)

    consts = (r_all, wab, waff, s_ext)
    flops = 2 * bp * (ktot * (2 * d0d1 + dcat) + d0d1 * dcat
                      + ktot * dcat + dcat * do)
    itemsize = np.dtype(compute_dtype).itemsize
    bytes_accessed = (bp * ktot * itemsize + bp * do * 4
                      + sum(int(a.size) * itemsize for a in consts))

    out = pl.pallas_call(
        functools.partial(_mi3_kernel, d0d1=d0d1),
        out_shape=jax.ShapeDtypeStruct((bp, do), f32),
        grid=grid,
        in_specs=[pl.BlockSpec((tb, ktot), lambda i: (i, 0))]
                 + [pl.BlockSpec(a.shape, lambda i: (0, 0)) for a in consts],
        out_specs=pl.BlockSpec((tb, do), lambda i: (i, 0)),
        compiler_params=pltpu.CompilerParams(
            dimension_semantics=("parallel",),
            vmem_limit_bytes=32 * 1024 * 1024),
        cost_estimate=pl.CostEstimate(flops=flops, transcendentals=0,
                                      bytes_accessed=bytes_accessed),
    )(m_all, *consts)

    return out[:B] if bp != B else out


def reference(m1, m2, m3, params):
    """Pure-JAX mirror of the PyTorch forward (correctness check)."""
    Wa, Ua, Va, ba = params["Wa"], params["Ua"], params["Va"], params["ba"]
    Wb, Ub, Vb, bb = params["Wb"], params["Ub"], params["Vb"], params["bb"]
    # module a : 'matrix3D'
    Wp = jnp.einsum("bn,nmpq->bmpq", m1, Wa) + Va
    bpa = jnp.einsum("bn,npq->bpq", m1, Ua) + ba
    out_a = jnp.einsum("bm,bmpq->bpq", m2, Wp) + bpa
    # module b : 'matrix'
    Wp2 = jnp.einsum("bn,nmd->bmd", m1, Wb) + Vb
    bpb = m1 @ Ub + bb
    out_b = jnp.einsum("bm,bmd->bd", m2, Wp2) + bpb
    return jnp.einsum("bp,bpq->bq", m3, out_a) + out_b


if __name__ == "__main__":
    key = jax.random.PRNGKey(0)
    d0, d1, d2, do = 8, 16, 8, 32     # input_dims=[8, 16, 8], output_dim=32
    ks = jax.random.split(key, 16)

    def rnd(k, shape, scale=0.1):
        return (scale * jax.random.normal(k, shape)).astype(jnp.float32)

    # deterministic (xavier-ish scaled normal) parameter init
    params = {
        "Wa": rnd(ks[0], (d0, d1, d2, do)),   # matrix3D: W
        "Ua": rnd(ks[1], (d0, d2, do)),       # matrix3D: U
        "Va": rnd(ks[2], (d1, d2, do)),       # matrix3D: V
        "ba": rnd(ks[3], (d2, do)),           # matrix3D: b
        "Wb": rnd(ks[4], (d0, d1, do)),       # matrix:   W
        "Ub": rnd(ks[5], (d0, do)),           # matrix:   U
        "Vb": rnd(ks[6], (d1, do)),           # matrix:   V
        "bb": rnd(ks[7], (do,)),              # matrix:   b
    }

    fwd_f32 = jax.jit(lambda a, b, c: mi3modal_forward(
        a, b, c, params, compute_dtype=jnp.float32))
    fwd_bf16 = jax.jit(lambda a, b, c: mi3modal_forward(
        a, b, c, params, compute_dtype=jnp.bfloat16))

    # ---- test 1: small batch, f32 compute path, tight tolerance (algorithmic check) ----
    B = 4
    m1 = rnd(ks[8], (B, d0), 1.0)
    m2 = rnd(ks[9], (B, d1), 1.0)
    m3 = rnd(ks[10], (B, d2), 1.0)
    out = jax.block_until_ready(fwd_f32(m1, m2, m3))
    ref = reference(m1, m2, m3, params)
    assert out.shape == (B, do)
    max_err = float(jnp.max(jnp.abs(out - ref)))
    assert jnp.allclose(out, ref, atol=1e-4, rtol=1e-4), f"f32 max_err={max_err}"

    # ---- test 2: large batch (multi-step grid, batch padding, megacore path), bf16 MXU ----
    B = 2500
    m1 = rnd(ks[11], (B, d0), 1.0)
    m2 = rnd(ks[12], (B, d1), 1.0)
    m3 = rnd(ks[13], (B, d2), 1.0)
    out = jax.block_until_ready(fwd_bf16(m1, m2, m3))
    ref = reference(m1, m2, m3, params)
    assert out.shape == (B, do)
    max_err = float(jnp.max(jnp.abs(out - ref)))
    scale = float(jnp.max(jnp.abs(ref)))
    assert max_err <= 3e-2 * max(scale, 1.0), f"bf16 max_err={max_err} scale={scale}"

    print("KERNEL_OK")
</pallas_src>

<mosaic_0001>
module attributes {stable_mosaic.version = 11 : i64} {
  func.func @_mi3_kernel(%arg0: i32, %arg1: memref<8x33xf32, #tpu.memory_space<vmem>>, %arg2: memref<33x544xf32, #tpu.memory_space<vmem>>, %arg3: memref<128x288xf32, #tpu.memory_space<vmem>>, %arg4: memref<33x288xf32, #tpu.memory_space<vmem>>, %arg5: memref<288x32xf32, #tpu.memory_space<vmem>>, %arg6: memref<8x32xf32, #tpu.memory_space<vmem>>) attributes {dimension_semantics = [#tpu.dimension_semantics<parallel>], iteration_bounds = array<i64: 1>, scalar_prefetch = 0 : i64, scratch_operands = 0 : i64, tpu.core_type = #tpu.core_type<tc>, window_params = [{transform_indices = @transform_0, window_bounds = array<i64: 8, 33>}, {pipeline_mode = #tpu.pipeline_mode<synchronous>, transform_indices = @transform_1, window_bounds = array<i64: 33, 544>}, {pipeline_mode = #tpu.pipeline_mode<synchronous>, transform_indices = @transform_2, window_bounds = array<i64: 128, 288>}, {pipeline_mode = #tpu.pipeline_mode<synchronous>, transform_indices = @transform_3, window_bounds = array<i64: 33, 288>}, {pipeline_mode = #tpu.pipeline_mode<synchronous>, transform_indices = @transform_4, window_bounds = array<i64: 288, 32>}, {transform_indices = @transform_5, window_bounds = array<i64: 8, 32>}]} {
    %c0 = arith.constant 0 : index
    %c0_0 = arith.constant 0 : index
    %0 = vector.load %arg1[%c0, %c0_0] : memref<8x33xf32, #tpu.memory_space<vmem>>, vector<8x33xf32>
    %c0_1 = arith.constant 0 : index
    %c0_2 = arith.constant 0 : index
    %1 = vector.load %arg2[%c0_1, %c0_2] : memref<33x544xf32, #tpu.memory_space<vmem>>, vector<33x544xf32>
    %cst = arith.constant dense<0.000000e+00> : vector<8x544xf32>
    %2 = tpu.matmul %0, %1, %cst {dimension_numbers = #tpu.dot_dimension_numbers<[1], [0], [0], [1], [0, 0, 1, 1], [], []>} : vector<8x33xf32>, vector<33x544xf32>, vector<8x544xf32> -> vector<8x544xf32>
    %3 = vector.extract_strided_slice %2 {offsets = [0, 0], sizes = [8, 128], strides = [1, 1]} : vector<8x544xf32> to vector<8x128xf32>
    %4 = vector.extract_strided_slice %2 {offsets = [0, 128], sizes = [8, 128], strides = [1, 1]} : vector<8x544xf32> to vector<8x128xf32>
    %5 = vector.extract_strided_slice %2 {offsets = [0, 256], sizes = [8, 288], strides = [1, 1]} : vector<8x544xf32> to vector<8x288xf32>
    %6 = arith.mulf %3, %4 : vector<8x128xf32>
    %c0_3 = arith.constant 0 : index
    %c0_4 = arith.constant 0 : index
    %7 = vector.load %arg3[%c0_3, %c0_4] : memref<128x288xf32, #tpu.memory_space<vmem>>, vector<128x288xf32>
    %cst_5 = arith.constant dense<0.000000e+00> : vector<8x288xf32>
    %8 = tpu.matmul %6, %7, %cst_5 {dimension_numbers = #tpu.dot_dimension_numbers<[1], [0], [0], [1], [0, 0, 1, 1], [], []>} : vector<8x128xf32>, vector<128x288xf32>, vector<8x288xf32> -> vector<8x288xf32>
    %c0_6 = arith.constant 0 : index
    %c0_7 = arith.constant 0 : index
    %9 = vector.load %arg4[%c0_6, %c0_7] : memref<33x288xf32, #tpu.memory_space<vmem>>, vector<33x288xf32>
    %cst_8 = arith.constant dense<0.000000e+00> : vector<8x288xf32>
    %10 = tpu.matmul %0, %9, %cst_8 {dimension_numbers = #tpu.dot_dimension_numbers<[1], [0], [0], [1], [0, 0, 1, 1], [], []>} : vector<8x33xf32>, vector<33x288xf32>, vector<8x288xf32> -> vector<8x288xf32>
    %11 = arith.addf %8, %10 : vector<8x288xf32>
    %12 = arith.mulf %5, %11 : vector<8x288xf32>
    %c0_9 = arith.constant 0 : index
    %c0_10 = arith.constant 0 : index
    %13 = vector.load %arg5[%c0_9, %c0_10] : memref<288x32xf32, #tpu.memory_space<vmem>>, vector<288x32xf32>
    %cst_11 = arith.constant dense<0.000000e+00> : vector<8x32xf32>
    %14 = tpu.matmul %12, %13, %cst_11 {dimension_numbers = #tpu.dot_dimension_numbers<[1], [0], [0], [1], [0, 0, 1, 1], [], []>} : vector<8x288xf32>, vector<288x32xf32>, vector<8x32xf32> -> vector<8x32xf32>
    %c0_12 = arith.constant 0 : index
    %c0_13 = arith.constant 0 : index
    %15 = vector.load %arg6[%c0_12, %c0_13] : memref<8x32xf32, #tpu.memory_space<vmem>>, vector<8x32xf32>
    tpu.vector_store %arg6[%c0_12, %c0_13], %14 {strides = array<i32>} : memref<8x32xf32, #tpu.memory_space<vmem>>, vector<8x32xf32>,
    return
  }
  func.func @transform_0(%arg0: i32) -> (i32, i32) {
    %c0_i32 = arith.constant 0 : i32
    %c0_i32_0 = arith.constant 0 : i32
    return %arg0, %c0_i32 : i32, i32
  }
  func.func @transform_1(%arg0: i32) -> (i32, i32) {
    %c0_i32 = arith.constant 0 : i32
    %c0_i32_0 = arith.constant 0 : i32
    %c0_i32_1 = arith.constant 0 : i32
    return %c0_i32, %c0_i32_0 : i32, i32
  }
  func.func @transform_2(%arg0: i32) -> (i32, i32) {
    %c0_i32 = arith.constant 0 : i32
    %c0_i32_0 = arith.constant 0 : i32
    %c0_i32_1 = arith.constant 0 : i32
    return %c0_i32, %c0_i32_0 : i32, i32
  }
  func.func @transform_3(%arg0: i32) -> (i32, i32) {
    %c0_i32 = arith.constant 0 : i32
    %c0_i32_0 = arith.constant 0 : i32
    %c0_i32_1 = arith.constant 0 : i32
    return %c0_i32, %c0_i32_0 : i32, i32
  }
  func.func @transform_4(%arg0: i32) -> (i32, i32) {
    %c0_i32 = arith.constant 0 : i32
    %c0_i32_0 = arith.constant 0 : i32
    %c0_i32_1 = arith.constant 0 : i32
    return %c0_i32, %c0_i32_0 : i32, i32
  }
  func.func @transform_5(%arg0: i32) -> (i32, i32) {
    %c0_i32 = arith.constant 0 : i32
    %c0_i32_0 = arith.constant 0 : i32
    return %arg0, %c0_i32 : i32, i32
  }
}

</mosaic_0001>

<llo_original>
// kernel: _lambda_.1
$region0: #{_lambda_.1}
  #allocation0 [shape = 'u32[]', space=smem, size = 0x4, offset = 0x4, fixed_abs, tag = 'smem constant byte address 0x4 - core index']
  #allocation1 [shape = 'u32[144,128]{1,0:T(1,128)}', space=vmem, size = 0x12000, scoped, tag = 'internal scratch']
  %s0 = inlined_call_operand.vmem [shape: f32[8,33], index: 0, kind: input, shape index: {}]
  %s1 = inlined_call_operand.hbm [shape: f32[33,544], index: 1, kind: input, shape index: {}]
  %s2 = inlined_call_operand.hbm [shape: f32[128,288], index: 2, kind: input, shape index: {}]
  %s3 = inlined_call_operand.hbm [shape: f32[33,288], index: 3, kind: input, shape index: {}]
  %s4 = inlined_call_operand.hbm [shape: f32[288,32], index: 4, kind: input, shape index: {}]
  %s5 = inlined_call_operand.vmem [shape: f32[8,32], index: 5, kind: output, shape index: {}]
  %s6 = sld [smem:[#allocation0]]
  $region46: #{_lambda_.1} parent=0
    _
  %s8 = ssub.s32 1, %s6
  %s9 = scalar_select 0, %s8, %s6
  $region1: #{_lambda_.1} parent=0
    #allocation2 [shape = 'u8[102400]{0}', space=vmem, size = 0x19000, scoped, tag = 'input window, operand 1, single buffered']
    #allocation3 [shape = 's32[1]{0}', space=sflag, size = 0x4, scoped, tag = 'scoped memory for _lambda_.1']
    #allocation4 [shape = 'u8[196608]{0}', space=vmem, size = 0x30000, scoped, tag = 'input window, operand 2, single buffered']
    #allocation5 [shape = 's32[1]{0}', space=sflag, size = 0x4, scoped, tag = 'scoped memory for _lambda_.1']
    #allocation6 [shape = 'u8[61440]{0}', space=vmem, size = 0xf000, scoped, tag = 'input window, operand 3, single buffered']
    #allocation7 [shape = 'u8[147456]{0}', space=vmem, size = 0x24000, scoped, tag = 'input window, operand 4, single buffered']
    #allocation8 [shape = 's32[1]{0}', space=sflag, size = 0x4, scoped, tag = 'scoped memory for _lambda_.1']
    %10 = vsyncpa [#allocation3], 0
    %11 = vsyncpa [#allocation5], 0
    %12 = vsyncpa [#allocation8], 0
    // Predicated region
    $region2: #{_lambda_.1} parent=1 // pred_check
      _
    $region3: #{_lambda_.1} parent=1 // pred_check_branch
      %14 = sbr.rel (0) target = $region5
    $region4: #{_lambda_.1} parent=1 // pred_region
      _
    $region5: #{_lambda_.1} parent=1 // pred_fallthru
      _
    // Predicated region
    $region6: #{_lambda_.1} parent=1 // pred_check
      _
    $region7: #{_lambda_.1} parent=1 // pred_check_branch
      %16 = sbr.rel (0) target = $region9
    $region8: #{_lambda_.1} parent=1 // pred_region
      %s18 = ssub.s32 3200, 3200
      %19 = vsyncadd [#allocation3], %s18
      %s20 = sshll.u32 [#allocation2], 4
      %s21 = int_to_ptr.vmem [resolvable:$true] %s20
      %26 = dma.hbm_to_vmem [thread:$0]  %s1, 3200, %s21, [#allocation3], 640, 640, 40
    $region9: #{_lambda_.1} parent=1 // pred_fallthru
      _
    // Predicated region
    $region10: #{_lambda_.1} parent=1 // pred_check
      _
    $region11: #{_lambda_.1} parent=1 // pred_check_branch
      %28 = sbr.rel (0) target = $region13
    $region12: #{_lambda_.1} parent=1 // pred_region
      %s30 = ssub.s32 6144, 6144
      %31 = vsyncadd [#allocation5], %s30
      %s32 = sshll.u32 [#allocation4], 4
      %s33 = int_to_ptr.vmem [resolvable:$true] %s32
      %38 = dma.hbm_to_vmem [thread:$0]  %s2, 6144, %s33, [#allocation5], 384, 384, 24
    $region13: #{_lambda_.1} parent=1 // pred_fallthru
      _
    // Predicated region
    $region14: #{_lambda_.1} parent=1 // pred_check
      _
    $region15: #{_lambda_.1} parent=1 // pred_check_branch
      %40 = sbr.rel (0) target = $region17
    $region16: #{_lambda_.1} parent=1 // pred_region
      %s42 = ssub.s32 1920, 1920
      %43 = vsyncadd [#allocation5], %s42
      %s44 = sshll.u32 [#allocation6], 4
      %s45 = int_to_ptr.vmem [resolvable:$true] %s44
      %50 = dma.hbm_to_vmem [thread:$0]  %s3, 1920, %s45, [#allocation5], 384, 384, 24
    $region17: #{_lambda_.1} parent=1 // pred_fallthru
      _
    // Predicated region
    $region18: #{_lambda_.1} parent=1 // pred_check
      _
    $region19: #{_lambda_.1} parent=1 // pred_check_branch
      %52 = sbr.rel (0) target = $region21
    $region20: #{_lambda_.1} parent=1 // pred_region
      %s54 = ssub.s32 4608, 4608
      %55 = vsyncadd [#allocation8], %s54
      %s56 = sshll.u32 [#allocation7], 4
      %s57 = int_to_ptr.vmem [resolvable:$true] %s56
      %62 = dma.hbm_to_vmem [thread:$0]  %s4, 4608, %s57, [#allocation8], 128, 128, 8
    $region21: #{_lambda_.1} parent=1 // pred_fallthru
      _
    // Predicated region
    $region22: #{_lambda_.1} parent=1 // pred_check
      _
    $region23: #{_lambda_.1} parent=1 // pred_check_branch
      %64 = sbr.rel (0) target = $region25
    $region24: #{_lambda_.1} parent=1 // pred_region
      %65 = dma.done [#allocation3], 3200
    $region25: #{_lambda_.1} parent=1 // pred_fallthru
      _
    // Predicated region
    $region26: #{_lambda_.1} parent=1 // pred_check
      _
    $region27: #{_lambda_.1} parent=1 // pred_check_branch
      %67 = sbr.rel (0) target = $region29
    $region28: #{_lambda_.1} parent=1 // pred_region
      %68 = dma.done [#allocation5], 6144
    $region29: #{_lambda_.1} parent=1 // pred_fallthru
      _
    // Predicated region
    $region30: #{_lambda_.1} parent=1 // pred_check
      _
    $region31: #{_lambda_.1} parent=1 // pred_check_branch
      %70 = sbr.rel (0) target = $region33
    $region32: #{_lambda_.1} parent=1 // pred_region
      %71 = dma.done [#allocation5], 1920
    $region33: #{_lambda_.1} parent=1 // pred_fallthru
      _
    // Predicated region
    $region34: #{_lambda_.1} parent=1 // pred_check
      _
    $region35: #{_lambda_.1} parent=1 // pred_check_branch
      %73 = sbr.rel (0) target = $region37
    $region36: #{_lambda_.1} parent=1 // pred_region
      %74 = dma.done [#allocation8], 4608
    $region37: #{_lambda_.1} parent=1 // pred_fallthru
      _
    %v75 = vld [vmem:[%s0] sm:$0xff]
    %v76 = vld [vmem:[#allocation2] sm:$0xff]
    %v77 = vld [vmem:[#allocation2 + $0x8] sm:$0xff]
    %v78 = vld [vmem:[#allocation2 + $0x10] sm:$0xff]
    %v79 = vld [vmem:[#allocation2 + $0x18] sm:$0xff]
    %v80 = vld [vmem:[#allocation2 + $0x20] sm:$0xff]
    %v81 = vld [vmem:[#allocation2 + $0x28] sm:$0xff]
    %v82 = vld [vmem:[#allocation2 + $0x30] sm:$0xff]
    %v83 = vld [vmem:[#allocation2 + $0x38] sm:$0xff]
    %v84 = vld [vmem:[#allocation2 + $0x40] sm:$0xff]
    %v85 = vld [vmem:[#allocation2 + $0x48] sm:$0xff]
    %v86 = vld [vmem:[#allocation2 + $0x50] sm:$0xff]
    %v87 = vld [vmem:[#allocation2 + $0x58] sm:$0xff]
    %v88 = vld [vmem:[#allocation2 + $0x60] sm:$0xff]
    %v89 = vld [vmem:[#allocation2 + $0x68] sm:$0xff]
    %v90 = vld [vmem:[#allocation2 + $0x70] sm:$0xff]
    %v91 = vld [vmem:[#allocation2 + $0x78] sm:$0xff]
    %v92 = vld [vmem:[#allocation2 + $0x80] sm:$0xff]
    %v93 = vld [vmem:[#allocation2 + $0x88] sm:$0xff]
    %v94 = vld [vmem:[#allocation2 + $0x90] sm:$0xff]
    %v95 = vld [vmem:[#allocation2 + $0x98] sm:$0xff]
    %v96 = vld [vmem:[#allocation2 + $0xa0] sm:$0x1]
    %v97 = vld [vmem:[#allocation2 + $0xa8] sm:$0x1]
    %v98 = vld [vmem:[#allocation2 + $0xb0] sm:$0x1]
    %v99 = vld [vmem:[#allocation2 + $0xb8] sm:$0x1]
    %v100 = vld [vmem:[#allocation2 + $0xc0] sm:$0x1]
    %vm101 = vcmask 269312
    %v103 = vsel %vm101, %v75, 0
    %vm105 = vcmask 1040384
    %v107 = vsel %vm105, %v96, 0
    %v110 = vsel %vm105, %v97, 0
    %v113 = vsel %vm105, %v98, 0
    %v116 = vsel %vm105, %v99, 0
    %v119 = vsel %vm105, %v100, 0
    %121 = vmatprep.subr.mxu0 %v77
    %122 = vmatpush1.msra.mxu0 %v76
    %123 = vmatprep.subr.mxu0 %v82
    %124 = vmatpush1.msra.mxu0 %v81
    %125 = vmatprep.subr.mxu0 %v87
    %126 = vmatpush1.msra.mxu0 %v86
    %127 = vmatprep.subr.mxu0 %v92
    %128 = vmatpush1.msra.mxu0 %v91
    %129 = vmatprep.subr.mxu0 %v110
    %130 = vmatpush1.msra.mxu0 %v107
    %131 = vmatprep.subr.mxu0 0.0
    %132 = vmatpush1.msra.mxu0 0.0
    %133 = vmatprep.subr.mxu0 0.0
    %134 = vmatpush1.msra.mxu0 0.0
    %135 = vmatprep.subr.mxu0 0.0
    %136 = vmatpush1.msra.mxu0 0.0
    %137 = vmatprep.subr.mxu0 0.0
    %138 = vmatpush1.msra.mxu0 0.0
    %139 = vmatprep.subr.mxu0 0.0
    %140 = vmatpush1.msra.mxu0 0.0
    %141 = vmatprep.subr.mxu0 0.0
    %142 = vmatpush1.msra.mxu0 0.0
    %143 = vmatprep.subr.mxu0 0.0
    %144 = vmatpush1.msra.mxu0 0.0
    %145 = vmatprep.subr.mxu0 0.0
    %146 = vmatpush1.msra.mxu0 0.0
    %147 = vmatprep.subr.mxu0 0.0
    %148 = vmatpush1.msra.mxu0 0.0
    %149 = vmatprep.subr.mxu0 0.0
    %150 = vmatpush1.msra.mxu0 0.0
    %151 = vmatprep.subr.mxu0 0.0
    %152 = vmatpush1.msra.mxu0 0.0
    %153 = vmatprep.subr.mxu0 0.0
    %154 = vmatpush1.msra.mxu0 0.0
    %155 = vmatprep.subr.mxu0 0.0
    %156 = vmatpush1.msra.mxu0 0.0
    %157 = vmatprep.subr.mxu0 0.0
    %158 = vmatpush1.msra.mxu0 0.0
    %159 = vmatprep.subr.mxu0 0.0
    %160 = vmatpush1.msra.mxu0 0.0
    %161 = vmatprep.subr.mxu0 0.0
    %162 = vmatpush1.msra.mxu0 0.0
    %163 = vmatprep.subr.mxu0 0.0
    %164 = vmatpush1.msra.mxu0 0.0
    %165 = vmatprep.subr.mxu0 0.0
    %166 = vmatpush1.msra.mxu0 0.0
    %167 = vmatprep.subr.mxu0 0.0
    %168 = vmatpush1.msra.mxu0 0.0
    %169 = vmatprep.subr.mxu0 0.0
    %170 = vmatpush1.msra.mxu0 0.0
    %171 = vmatprep.subr.mxu0 0.0
    %172 = vmatpush1.msra.mxu0 0.0
    %173 = vmatprep.subr.mxu0 0.0
    %174 = vmatpush1.msra.mxu0 0.0
    %175 = vmatprep.subr.mxu0 0.0
    %176 = vmatpush1.msra.mxu0 0.0
    %177 = vmatprep.subr.mxu0 0.0
    %178 = vmatpush1.msra.mxu0 0.0
    %179 = vmatprep.subr.mxu0 0.0
    %180 = vmatpush1.msra.mxu0 0.0
    %181 = vmatprep.subr.mxu0 0.0
    %182 = vmatpush1.msra.mxu0 0.0
    %183 = vmatprep.subr.mxu0 0.0
    %184 = vmatpush1.msra.mxu0 0.0
    %185 = vmatprep.mubr.f32.mxu0 0.0
    %186 = vmatmul.mubr.f32.gmra.mrb[0].mxu0 %v103
    %v187 = vpop.f32.mrb[0].mxu0
    %v188 = vadd.f32 0.0, %v187
    %v189 = vpop.f32.mrb[0].mxu0
    %v190 = vadd.f32 0.0, %v189
    %191 = vdwg.mxu0
    %192 = vmatprep.subr.mxu0 %v79
    %193 = vmatpush1.msra.mxu0 %v78
    %194 = vmatprep.subr.mxu0 %v84
    %195 = vmatpush1.msra.mxu0 %v83
    %196 = vmatprep.subr.mxu0 %v89
    %197 = vmatpush1.msra.mxu0 %v88
    %198 = vmatprep.subr.mxu0 %v94
    %199 = vmatpush1.msra.mxu0 %v93
    %200 = vmatprep.subr.mxu0 %v116
    %201 = vmatpush1.msra.mxu0 %v113
    %202 = vmatprep.subr.mxu0 0.0
    %203 = vmatpush1.msra.mxu0 0.0
    %204 = vmatprep.subr.mxu0 0.0
    %205 = vmatpush1.msra.mxu0 0.0
    %206 = vmatprep.subr.mxu0 0.0
    %207 = vmatpush1.msra.mxu0 0.0
    %208 = vmatprep.subr.mxu0 0.0
    %209 = vmatpush1.msra.mxu0 0.0
    %210 = vmatprep.subr.mxu0 0.0
    %211 = vmatpush1.msra.mxu0 0.0
    %212 = vmatprep.subr.mxu0 0.0
    %213 = vmatpush1.msra.mxu0 0.0
    %214 = vmatprep.subr.mxu0 0.0
    %215 = vmatpush1.msra.mxu0 0.0
    %216 = vmatprep.subr.mxu0 0.0
    %217 = vmatpush1.msra.mxu0 0.0
    %218 = vmatprep.subr.mxu0 0.0
    %219 = vmatpush1.msra.mxu0 0.0
    %220 = vmatprep.subr.mxu0 0.0
    %221 = vmatpush1.msra.mxu0 0.0
    %222 = vmatprep.subr.mxu0 0.0
    %223 = vmatpush1.msra.mxu0 0.0
    %224 = vmatprep.subr.mxu0 0.0
    %225 = vmatpush1.msra.mxu0 0.0
    %226 = vmatprep.subr.mxu0 0.0
    %227 = vmatpush1.msra.mxu0 0.0
    %228 = vmatprep.subr.mxu0 0.0
    %229 = vmatpush1.msra.mxu0 0.0
    %230 = vmatprep.subr.mxu0 0.0
    %231 = vmatpush1.msra.mxu0 0.0
    %232 = vmatprep.subr.mxu0 0.0
    %233 = vmatpush1.msra.mxu0 0.0
    %234 = vmatprep.subr.mxu0 0.0
    %235 = vmatpush1.msra.mxu0 0.0
    %236 = vmatprep.subr.mxu0 0.0
    %237 = vmatpush1.msra.mxu0 0.0
    %238 = vmatprep.subr.mxu0 0.0
    %239 = vmatpush1.msra.mxu0 0.0
    %240 = vmatprep.subr.mxu0 0.0
    %241 = vmatpush1.msra.mxu0 0.0
    %242 = vmatprep.subr.mxu0 0.0
    %243 = vmatpush1.msra.mxu0 0.0
    %244 = vmatprep.subr.mxu0 0.0
    %245 = vmatpush1.msra.mxu0 0.0
    %246 = vmatprep.subr.mxu0 0.0
    %247 = vmatpush1.msra.mxu0 0.0
    %248 = vmatprep.subr.mxu0 0.0
    %249 = vmatpush1.msra.mxu0 0.0
    %250 = vmatprep.subr.mxu0 0.0
    %251 = vmatpush1.msra.mxu0 0.0
    %252 = vmatprep.subr.mxu0 0.0
    %253 = vmatpush1.msra.mxu0 0.0
    %254 = vmatprep.subr.mxu0 0.0
    %255 = vmatpush1.msra.mxu0 0.0
    %256 = vmatprep.mubr.f32.mxu0 0.0
    %257 = vmatmul.mubr.f32.gmra.mrb[0].mxu0 %v103
    %v258 = vpop.f32.mrb[0].mxu0
    %v259 = vadd.f32 0.0, %v258
    %v260 = vpop.f32.mrb[0].mxu0
    %v261 = vadd.f32 0.0, %v260
    %262 = vdwg.mxu0
    %263 = vmatprep.subr.mxu0 0.0
    %264 = vmatpush1.msra.mxu0 %v80
    %265 = vmatprep.subr.mxu0 0.0
    %266 = vmatpush1.msra.mxu0 %v85
    %267 = vmatprep.subr.mxu0 0.0
    %268 = vmatpush1.msra.mxu0 %v90
    %269 = vmatprep.subr.mxu0 0.0
    %270 = vmatpush1.msra.mxu0 %v95
    %271 = vmatprep.subr.mxu0 0.0
    %272 = vmatpush1.msra.mxu0 %v119
    %273 = vmatprep.subr.mxu0 0.0
    %274 = vmatpush1.msra.mxu0 0.0
    %275 = vmatprep.subr.mxu0 0.0
    %276 = vmatpush1.msra.mxu0 0.0
    %277 = vmatprep.subr.mxu0 0.0
    %278 = vmatpush1.msra.mxu0 0.0
    %279 = vmatprep.subr.mxu0 0.0
    %280 = vmatpush1.msra.mxu0 0.0
    %281 = vmatprep.subr.mxu0 0.0
    %282 = vmatpush1.msra.mxu0 0.0
    %283 = vmatprep.subr.mxu0 0.0
    %284 = vmatpush1.msra.mxu0 0.0
    %285 = vmatprep.subr.mxu0 0.0
    %286 = vmatpush1.msra.mxu0 0.0
    %287 = vmatprep.subr.mxu0 0.0
    %288 = vmatpush1.msra.mxu0 0.0
    %289 = vmatprep.subr.mxu0 0.0
    %290 = vmatpush1.msra.mxu0 0.0
    %291 = vmatprep.subr.mxu0 0.0
    %292 = vmatpush1.msra.mxu0 0.0
    %293 = vmatprep.subr.mxu0 0.0
    %294 = vmatpush1.msra.mxu0 0.0
    %295 = vmatprep.subr.mxu0 0.0
    %296 = vmatpush1.msra.mxu0 0.0
    %297 = vmatprep.subr.mxu0 0.0
    %298 = vmatpush1.msra.mxu0 0.0
    %299 = vmatprep.subr.mxu0 0.0
    %300 = vmatpush1.msra.mxu0 0.0
    %301 = vmatprep.subr.mxu0 0.0
    %302 = vmatpush1.msra.mxu0 0.0
    %303 = vmatprep.subr.mxu0 0.0
    %304 = vmatpush1.msra.mxu0 0.0
    %305 = vmatprep.subr.mxu0 0.0
    %306 = vmatpush1.msra.mxu0 0.0
    %307 = vmatprep.subr.mxu0 0.0
    %308 = vmatpush1.msra.mxu0 0.0
    %309 = vmatprep.subr.mxu0 0.0
    %310 = vmatpush1.msra.mxu0 0.0
    %311 = vmatprep.subr.mxu0 0.0
    %312 = vmatpush1.msra.mxu0 0.0
    %313 = vmatprep.subr.mxu0 0.0
    %314 = vmatpush1.msra.mxu0 0.0
    %315 = vmatprep.subr.mxu0 0.0
    %316 = vmatpush1.msra.mxu0 0.0
    %317 = vmatprep.subr.mxu0 0.0
    %318 = vmatpush1.msra.mxu0 0.0
    %319 = vmatprep.subr.mxu0 0.0
    %320 = vmatpush1.msra.mxu0 0.0
    %321 = vmatprep.subr.mxu0 0.0
    %322 = vmatpush1.msra.mxu0 0.0
    %323 = vmatprep.subr.mxu0 0.0
    %324 = vmatpush1.msra.mxu0 0.0
    %325 = vmatprep.subr.mxu0 0.0
    %326 = vmatpush1.msra.mxu0 0.0
    %327 = vmatprep.mubr.f32.mxu0 0.0
    %328 = vmatmul.mubr.f32.gmra.mrb[0].mxu0 %v103
    %v329 = vpop.f32.mrb[0].mxu0
    %v330 = vadd.f32 0.0, %v329
    %v331 = vpop.f32.mrb[0].mxu0
    %332 = vdwg.mxu0
    %v333 = vmul.f32 %v188, %v190
    %v334 = vld [vmem:[#allocation4] sm:$0xff]
    %v335 = vld [vmem:[#allocation4 + $0x8] sm:$0xff]
    %v336 = vld [vmem:[#allocation4 + $0x10] sm:$0xff]
    %v337 = vld [vmem:[#allocation4 + $0x18] sm:$0xff]
    %v338 = vld [vmem:[#allocation4 + $0x20] sm:$0xff]
    %v339 = vld [vmem:[#allocation4 + $0x28] sm:$0xff]
    %v340 = vld [vmem:[#allocation4 + $0x30] sm:$0xff]
    %v341 = vld [vmem:[#allocation4 + $0x38] sm:$0xff]
    %v342 = vld [vmem:[#allocation4 + $0x40] sm:$0xff]
    %v343 = vld [vmem:[#allocation4 + $0x48] sm:$0xff]
    %v344 = vld [vmem:[#allocation4 + $0x50] sm:$0xff]
    %v345 = vld [vmem:[#allocation4 + $0x58] sm:$0xff]
    %v346 = vld [vmem:[#allocation4 + $0x60] sm:$0xff]
    %v347 = vld [vmem:[#allocation4 + $0x68] sm:$0xff]
    %v348 = vld [vmem:[#allocation4 + $0x70] sm:$0xff]
    %v349 = vld [vmem:[#allocation4 + $0x78] sm:$0xff]
    %v350 = vld [vmem:[#allocation4 + $0x80] sm:$0xff]
    %v351 = vld [vmem:[#allocation4 + $0x88] sm:$0xff]
    %v352 = vld [vmem:[#allocation4 + $0x90] sm:$0xff]
    %v353 = vld [vmem:[#allocation4 + $0x98] sm:$0xff]
    %v354 = vld [vmem:[#allocation4 + $0xa0] sm:$0xff]
    %v355 = vld [vmem:[#allocation4 + $0xa8] sm:$0xff]
    %v356 = vld [vmem:[#allocation4 + $0xb0] sm:$0xff]
    %v357 = vld [vmem:[#allocation4 + $0xb8] sm:$0xff]
    %v358 = vld [vmem:[#allocation4 + $0xc0] sm:$0xff]
    %v359 = vld [vmem:[#allocation4 + $0xc8] sm:$0xff]
    %v360 = vld [vmem:[#allocation4 + $0xd0] sm:$0xff]
    %v361 = vld [vmem:[#allocation4 + $0xd8] sm:$0xff]
    %v362 = vld [vmem:[#allocation4 + $0xe0] sm:$0xff]
    %v363 = vld [vmem:[#allocation4 + $0xe8] sm:$0xff]
    %v364 = vld [vmem:[#allocation4 + $0xf0] sm:$0xff]
    %v365 = vld [vmem:[#allocation4 + $0xf8] sm:$0xff]
    %v366 = vld [vmem:[#allocation4 + $0x100] sm:$0xff]
    %v367 = vld [vmem:[#allocation4 + $0x108] sm:$0xff]
    %v368 = vld [vmem:[#allocation4 + $0x110] sm:$0xff]
    %v369 = vld [vmem:[#allocation4 + $0x118] sm:$0xff]
    %v370 = vld [vmem:[#allocation4 + $0x120] sm:$0xff]
    %v371 = vld [vmem:[#allocation4 + $0x128] sm:$0xff]
    %v372 = vld [vmem:[#allocation4 + $0x130] sm:$0xff]
    %v373 = vld [vmem:[#allocation4 + $0x138] sm:$0xff]
    %v374 = vld [vmem:[#allocation4 + $0x140] sm:$0xff]
    %v375 = vld [vmem:[#allocation4 + $0x148] sm:$0xff]
    %v376 = vld [vmem:[#allocation4 + $0x150] sm:$0xff]
    %v377 = vld [vmem:[#allocation4 + $0x158] sm:$0xff]
    %v378 = vld [vmem:[#allocation4 + $0x160] sm:$0xff]
    %v379 = vld [vmem:[#allocation4 + $0x168] sm:$0xff]
    %v380 = vld [vmem:[#allocation4 + $0x170] sm:$0xff]
    %v381 = vld [vmem:[#allocation4 + $0x178] sm:$0xff]
    %v382 = vld [vmem:[#allocation6] sm:$0xff]
    %v383 = vld [vmem:[#allocation6 + $0x8] sm:$0xff]
    %v384 = vld [vmem:[#allocation6 + $0x10] sm:$0xff]
    %v385 = vld [vmem:[#allocation6 + $0x18] sm:$0xff]
    %v386 = vld [vmem:[#allocation6 + $0x20] sm:$0xff]
    %v387 = vld [vmem:[#allocation6 + $0x28] sm:$0xff]
    %v388 = vld [vmem:[#allocation6 + $0x30] sm:$0xff]
    %v389 = vld [vmem:[#allocation6 + $0x38] sm:$0xff]
    %v390 = vld [vmem:[#allocation6 + $0x40] sm:$0xff]
    %v391 = vld [vmem:[#allocation6 + $0x48] sm:$0xff]
    %v392 = vld [vmem:[#allocation6 + $0x50] sm:$0xff]
    %v393 = vld [vmem:[#allocation6 + $0x58] sm:$0xff]
    %v394 = vld [vmem:[#allocation6 + $0x60] sm:$0x1]
    %v395 = vld [vmem:[#allocation6 + $0x68] sm:$0x1]
    %v396 = vld [vmem:[#allocation6 + $0x70] sm:$0x1]
    %v398 = vsel %vm105, %v394, 0
    %v401 = vsel %vm105, %v395, 0
    %v404 = vsel %vm105, %v396, 0
    %406 = vmatprep.subr.mxu0 %v383
    %407 = vmatpush1.msra.mxu0 %v382
    %408 = vmatprep.subr.mxu0 %v386
    %409 = vmatpush1.msra.mxu0 %v385
    %410 = vmatprep.subr.mxu0 %v389
    %411 = vmatpush1.msra.mxu0 %v388
    %412 = vmatprep.subr.mxu0 %v392
    %413 = vmatpush1.msra.mxu0 %v391
    %414 = vmatprep.subr.mxu0 %v401
    %415 = vmatpush1.msra.mxu0 %v398
    %416 = vmatprep.subr.mxu0 0.0
    %417 = vmatpush1.msra.mxu0 0.0
    %418 = vmatprep.subr.mxu0 0.0
    %419 = vmatpush1.msra.mxu0 0.0
    %420 = vmatprep.subr.mxu0 0.0
    %421 = vmatpush1.msra.mxu0 0.0
    %422 = vmatprep.subr.mxu0 0.0
    %423 = vmatpush1.msra.mxu0 0.0
    %424 = vmatprep.subr.mxu0 0.0
    %425 = vmatpush1.msra.mxu0 0.0
    %426 = vmatprep.subr.mxu0 0.0
    %427 = vmatpush1.msra.mxu0 0.0
    %428 = vmatprep.subr.mxu0 0.0
    %429 = vmatpush1.msra.mxu0 0.0
    %430 = vmatprep.subr.mxu0 0.0
    %431 = vmatpush1.msra.mxu0 0.0
    %432 = vmatprep.subr.mxu0 0.0
    %433 = vmatpush1.msra.mxu0 0.0
    %434 = vmatprep.subr.mxu0 0.0
    %435 = vmatpush1.msra.mxu0 0.0
    %436 = vmatprep.subr.mxu0 0.0
    %437 = vmatpush1.msra.mxu0 0.0
    %438 = vmatprep.subr.mxu0 0.0
    %439 = vmatpush1.msra.mxu0 0.0
    %440 = vmatprep.subr.mxu0 0.0
    %441 = vmatpush1.msra.mxu0 0.0
    %442 = vmatprep.subr.mxu0 0.0
    %443 = vmatpush1.msra.mxu0 0.0
    %444 = vmatprep.subr.mxu0 0.0
    %445 = vmatpush1.msra.mxu0 0.0
    %446 = vmatprep.subr.mxu0 0.0
    %447 = vmatpush1.msra.mxu0 0.0
    %448 = vmatprep.subr.mxu0 0.0
    %449 = vmatpush1.msra.mxu0 0.0
    %450 = vmatprep.subr.mxu0 0.0
    %451 = vmatpush1.msra.mxu0 0.0
    %452 = vmatprep.subr.mxu0 0.0
    %453 = vmatpush1.msra.mxu0 0.0
    %454 = vmatprep.subr.mxu0 0.0
    %455 = vmatpush1.msra.mxu0 0.0
    %456 = vmatprep.subr.mxu0 0.0
    %457 = vmatpush1.msra.mxu0 0.0
    %458 = vmatprep.subr.mxu0 0.0
    %459 = vmatpush1.msra.mxu0 0.0
    %460 = vmatprep.subr.mxu0 0.0
    %461 = vmatpush1.msra.mxu0 0.0
    %462 = vmatprep.subr.mxu0 0.0
    %463 = vmatpush1.msra.mxu0 0.0
    %464 = vmatprep.subr.mxu0 0.0
    %465 = vmatpush1.msra.mxu0 0.0
    %466 = vmatprep.subr.mxu0 0.0
    %467 = vmatpush1.msra.mxu0 0.0
    %468 = vmatprep.subr.mxu0 0.0
    %469 = vmatpush1.msra.mxu0 0.0
    %470 = vmatprep.mubr.f32.mxu0 0.0
    %471 = vmatmul.mubr.f32.gmra.mrb[0].mxu0 %v103
    %v472 = vpop.f32.mrb[0].mxu0
    %v473 = vadd.f32 0.0, %v472
    %v474 = vpop.f32.mrb[0].mxu0
    %v475 = vadd.f32 0.0, %v474
    %476 = vdwg.mxu0
    %477 = vmatprep.subr.mxu0 0.0
    %478 = vmatpush1.msra.mxu0 %v384
    %479 = vmatprep.subr.mxu0 0.0
    %480 = vmatpush1.msra.mxu0 %v387
    %481 = vmatprep.subr.mxu0 0.0
    %482 = vmatpush1.msra.mxu0 %v390
    %483 = vmatprep.subr.mxu0 0.0
    %484 = vmatpush1.msra.mxu0 %v393
    %485 = vmatprep.subr.mxu0 0.0
    %486 = vmatpush1.msra.mxu0 %v404
    %487 = vmatprep.subr.mxu0 0.0
    %488 = vmatpush1.msra.mxu0 0.0
    %489 = vmatprep.subr.mxu0 0.0
    %490 = vmatpush1.msra.mxu0 0.0
    %491 = vmatprep.subr.mxu0 0.0
    %492 = vmatpush1.msra.mxu0 0.0
    %493 = vmatprep.subr.mxu0 0.0
    %494 = vmatpush1.msra.mxu0 0.0
    %495 = vmatprep.subr.mxu0 0.0
    %496 = vmatpush1.msra.mxu0 0.0
    %497 = vmatprep.subr.mxu0 0.0
    %498 = vmatpush1.msra.mxu0 0.0
    %499 = vmatprep.subr.mxu0 0.0
    %500 = vmatpush1.msra.mxu0 0.0
    %501 = vmatprep.subr.mxu0 0.0
    %502 = vmatpush1.msra.mxu0 0.0
    %503 = vmatprep.subr.mxu0 0.0
    %504 = vmatpush1.msra.mxu0 0.0
    %505 = vmatprep.subr.mxu0 0.0
    %506 = vmatpush1.msra.mxu0 0.0
    %507 = vmatprep.subr.mxu0 0.0
    %508 = vmatpush1.msra.mxu0 0.0
    %509 = vmatprep.subr.mxu0 0.0
    %510 = vmatpush1.msra.mxu0 0.0
    %511 = vmatprep.subr.mxu0 0.0
    %512 = vmatpush1.msra.mxu0 0.0
    %513 = vmatprep.subr.mxu0 0.0
    %514 = vmatpush1.msra.mxu0 0.0
    %515 = vmatprep.subr.mxu0 0.0
    %516 = vmatpush1.msra.mxu0 0.0
    %517 = vmatprep.subr.mxu0 0.0
    %518 = vmatpush1.msra.mxu0 0.0
    %519 = vmatprep.subr.mxu0 0.0
    %520 = vmatpush1.msra.mxu0 0.0
    %521 = vmatprep.subr.mxu0 0.0
    %522 = vmatpush1.msra.mxu0 0.0
    %523 = vmatprep.subr.mxu0 0.0
    %524 = vmatpush1.msra.mxu0 0.0
    %525 = vmatprep.subr.mxu0 0.0
    %526 = vmatpush1.msra.mxu0 0.0
    %527 = vmatprep.subr.mxu0 0.0
    %528 = vmatpush1.msra.mxu0 0.0
    %529 = vmatprep.subr.mxu0 0.0
    %530 = vmatpush1.msra.mxu0 0.0
    %531 = vmatprep.subr.mxu0 0.0
    %532 = vmatpush1.msra.mxu0 0.0
    %533 = vmatprep.subr.mxu0 0.0
    %534 = vmatpush1.msra.mxu0 0.0
    %535 = vmatprep.subr.mxu0 0.0
    %536 = vmatpush1.msra.mxu0 0.0
    %537 = vmatprep.subr.mxu0 0.0
    %538 = vmatpush1.msra.mxu0 0.0
    %539 = vmatprep.subr.mxu0 0.0
    %540 = vmatpush1.msra.mxu0 0.0
    %541 = vmatprep.mubr.f32.mxu0 0.0
    %542 = vmatmul.mubr.f32.gmra.mrb[0].mxu0 %v103
    %v543 = vpop.f32.mrb[0].mxu0
    %v544 = vadd.f32 0.0, %v543
    %v545 = vpop.f32.mrb[0].mxu0
    %546 = vdwg.mxu0
    %547 = vmatprep.subr.mxu0 %v335
    %548 = vmatpush1.msra.mxu0 %v334
    %549 = vmatprep.subr.mxu0 %v338
    %550 = vmatpush1.msra.mxu0 %v337
    %551 = vmatprep.subr.mxu0 %v341
    %552 = vmatpush1.msra.mxu0 %v340
    %553 = vmatprep.subr.mxu0 %v344
    %554 = vmatpush1.msra.mxu0 %v343
    %555 = vmatprep.subr.mxu0 %v347
    %556 = vmatpush1.msra.mxu0 %v346
    %557 = vmatprep.subr.mxu0 %v350
    %558 = vmatpush1.msra.mxu0 %v349
    %559 = vmatprep.subr.mxu0 %v353
    %560 = vmatpush1.msra.mxu0 %v352
    %561 = vmatprep.subr.mxu0 %v356
    %562 = vmatpush1.msra.mxu0 %v355
    %563 = vmatprep.subr.mxu0 %v359
    %564 = vmatpush1.msra.mxu0 %v358
    %565 = vmatprep.subr.mxu0 %v362
    %566 = vmatpush1.msra.mxu0 %v361
    %567 = vmatprep.subr.mxu0 %v365
    %568 = vmatpush1.msra.mxu0 %v364
    %569 = vmatprep.subr.mxu0 %v368
    %570 = vmatpush1.msra.mxu0 %v367
    %571 = vmatprep.subr.mxu0 %v371
    %572 = vmatpush1.msra.mxu0 %v370
    %573 = vmatprep.subr.mxu0 %v374
    %574 = vmatpush1.msra.mxu0 %v373
    %575 = vmatprep.subr.mxu0 %v377
    %576 = vmatpush1.msra.mxu0 %v376
    %577 = vmatprep.subr.mxu0 %v380
    %578 = vmatpush1.msra.mxu0 %v379
    %579 = vmatprep.subr.mxu0 0.0
    %580 = vmatpush1.msra.mxu0 0.0
    %581 = vmatprep.subr.mxu0 0.0
    %582 = vmatpush1.msra.mxu0 0.0
    %583 = vmatprep.subr.mxu0 0.0
    %584 = vmatpush1.msra.mxu0 0.0
    %585 = vmatprep.subr.mxu0 0.0
    %586 = vmatpush1.msra.mxu0 0.0
    %587 = vmatprep.subr.mxu0 0.0
    %588 = vmatpush1.msra.mxu0 0.0
    %589 = vmatprep.subr.mxu0 0.0
    %590 = vmatpush1.msra.mxu0 0.0
    %591 = vmatprep.subr.mxu0 0.0
    %592 = vmatpush1.msra.mxu0 0.0
    %593 = vmatprep.subr.mxu0 0.0
    %594 = vmatpush1.msra.mxu0 0.0
    %595 = vmatprep.subr.mxu0 0.0
    %596 = vmatpush1.msra.mxu0 0.0
    %597 = vmatprep.subr.mxu0 0.0
    %598 = vmatpush1.msra.mxu0 0.0
    %599 = vmatprep.subr.mxu0 0.0
    %600 = vmatpush1.msra.mxu0 0.0
    %601 = vmatprep.subr.mxu0 0.0
    %602 = vmatpush1.msra.mxu0 0.0
    %603 = vmatprep.subr.mxu0 0.0
    %604 = vmatpush1.msra.mxu0 0.0
    %605 = vmatprep.subr.mxu0 0.0
    %606 = vmatpush1.msra.mxu0 0.0
    %607 = vmatprep.subr.mxu0 0.0
    %608 = vmatpush1.msra.mxu0 0.0
    %609 = vmatprep.subr.mxu0 0.0
    %610 = vmatpush1.msra.mxu0 0.0
    %611 = vmatprep.mubr.f32.mxu0 0.0
    %612 = vmatmul.mubr.f32.gmra.mrb[0].mxu0 %v333
    %v613 = vpop.f32.mrb[0].mxu0
    %v614 = vadd.f32 %v473, %v613
    %v615 = vpop.f32.mrb[0].mxu0
    %v616 = vadd.f32 %v475, %v615
    %617 = vdwg.mxu0
    %618 = vmatprep.subr.mxu0 0.0
    %619 = vmatpush1.msra.mxu0 %v336
    %620 = vmatprep.subr.mxu0 0.0
    %621 = vmatpush1.msra.mxu0 %v339
    %622 = vmatprep.subr.mxu0 0.0
    %623 = vmatpush1.msra.mxu0 %v342
    %624 = vmatprep.subr.mxu0 0.0
    %625 = vmatpush1.msra.mxu0 %v345
    %626 = vmatprep.subr.mxu0 0.0
    %627 = vmatpush1.msra.mxu0 %v348
    %628 = vmatprep.subr.mxu0 0.0
    %629 = vmatpush1.msra.mxu0 %v351
    %630 = vmatprep.subr.mxu0 0.0
    %631 = vmatpush1.msra.mxu0 %v354
    %632 = vmatprep.subr.mxu0 0.0
    %633 = vmatpush1.msra.mxu0 %v357
    %634 = vmatprep.subr.mxu0 0.0
    %635 = vmatpush1.msra.mxu0 %v360
    %636 = vmatprep.subr.mxu0 0.0
    %637 = vmatpush1.msra.mxu0 %v363
    %638 = vmatprep.subr.mxu0 0.0
    %639 = vmatpush1.msra.mxu0 %v366
    %640 = vmatprep.subr.mxu0 0.0
    %641 = vmatpush1.msra.mxu0 %v369
    %642 = vmatprep.subr.mxu0 0.0
    %643 = vmatpush1.msra.mxu0 %v372
    %644 = vmatprep.subr.mxu0 0.0
    %645 = vmatpush1.msra.mxu0 %v375
    %646 = vmatprep.subr.mxu0 0.0
    %647 = vmatpush1.msra.mxu0 %v378
    %648 = vmatprep.subr.mxu0 0.0
    %649 = vmatpush1.msra.mxu0 %v381
    %650 = vmatprep.subr.mxu0 0.0
    %651 = vmatpush1.msra.mxu0 0.0
    %652 = vmatprep.subr.mxu0 0.0
    %653 = vmatpush1.msra.mxu0 0.0
    %654 = vmatprep.subr.mxu0 0.0
    %655 = vmatpush1.msra.mxu0 0.0
    %656 = vmatprep.subr.mxu0 0.0
    %657 = vmatpush1.msra.mxu0 0.0
    %658 = vmatprep.subr.mxu0 0.0
    %659 = vmatpush1.msra.mxu0 0.0
    %660 = vmatprep.subr.mxu0 0.0
    %661 = vmatpush1.msra.mxu0 0.0
    %662 = vmatprep.subr.mxu0 0.0
    %663 = vmatpush1.msra.mxu0 0.0
    %664 = vmatprep.subr.mxu0 0.0
    %665 = vmatpush1.msra.mxu0 0.0
    %666 = vmatprep.subr.mxu0 0.0
    %667 = vmatpush1.msra.mxu0 0.0
    %668 = vmatprep.subr.mxu0 0.0
    %669 = vmatpush1.msra.mxu0 0.0
    %670 = vmatprep.subr.mxu0 0.0
    %671 = vmatpush1.msra.mxu0 0.0
    %672 = vmatprep.subr.mxu0 0.0
    %673 = vmatpush1.msra.mxu0 0.0
    %674 = vmatprep.subr.mxu0 0.0
    %675 = vmatpush1.msra.mxu0 0.0
    %676 = vmatprep.subr.mxu0 0.0
    %677 = vmatpush1.msra.mxu0 0.0
    %678 = vmatprep.subr.mxu0 0.0
    %679 = vmatpush1.msra.mxu0 0.0
    %680 = vmatprep.subr.mxu0 0.0
    %681 = vmatpush1.msra.mxu0 0.0
    %682 = vmatprep.mubr.f32.mxu0 0.0
    %683 = vmatmul.mubr.f32.gmra.mrb[0].mxu0 %v333
    %v684 = vpop.f32.mrb[0].mxu0
    %v685 = vadd.f32 %v544, %v684
    %v686 = vpop.f32.mrb[0].mxu0
    %687 = vdwg.mxu0
    %v688 = vmul.f32 %v259, %v614
    %v689 = vmul.f32 %v261, %v616
    %v690 = vmul.f32 %v330, %v685
    %v691 = vld [vmem:[#allocation7] sm:$0xff]
    %v692 = vld [vmem:[#allocation7 + $0x8] sm:$0xff]
    %v693 = vld [vmem:[#allocation7 + $0x10] sm:$0xff]
    %v694 = vld [vmem:[#allocation7 + $0x18] sm:$0xff]
    %v695 = vld [vmem:[#allocation7 + $0x20] sm:$0xff]
    %v696 = vld [vmem:[#allocation7 + $0x28] sm:$0xff]
    %v697 = vld [vmem:[#allocation7 + $0x30] sm:$0xff]
    %v698 = vld [vmem:[#allocation7 + $0x38] sm:$0xff]
    %v699 = vld [vmem:[#allocation7 + $0x40] sm:$0xff]
    %v700 = vld [vmem:[#allocation7 + $0x48] sm:$0xff]
    %v701 = vld [vmem:[#allocation7 + $0x50] sm:$0xff]
    %v702 = vld [vmem:[#allocation7 + $0x58] sm:$0xff]
    %v703 = vld [vmem:[#allocation7 + $0x60] sm:$0xff]
    %v704 = vld [vmem:[#allocation7 + $0x68] sm:$0xff]
    %v705 = vld [vmem:[#allocation7 + $0x70] sm:$0xff]
    %v706 = vld [vmem:[#allocation7 + $0x78] sm:$0xff]
    %v707 = vld [vmem:[#allocation7 + $0x80] sm:$0xff]
    %v708 = vld [vmem:[#allocation7 + $0x88] sm:$0xff]
    %v709 = vld [vmem:[#allocation7 + $0x90] sm:$0xff]
    %v710 = vld [vmem:[#allocation7 + $0x98] sm:$0xff]
    %v711 = vld [vmem:[#allocation7 + $0xa0] sm:$0xff]
    %v712 = vld [vmem:[#allocation7 + $0xa8] sm:$0xff]
    %v713 = vld [vmem:[#allocation7 + $0xb0] sm:$0xff]
    %v714 = vld [vmem:[#allocation7 + $0xb8] sm:$0xff]
    %v715 = vld [vmem:[#allocation7 + $0xc0] sm:$0xff]
    %v716 = vld [vmem:[#allocation7 + $0xc8] sm:$0xff]
    %v717 = vld [vmem:[#allocation7 + $0xd0] sm:$0xff]
    %v718 = vld [vmem:[#allocation7 + $0xd8] sm:$0xff]
    %v719 = vld [vmem:[#allocation7 + $0xe0] sm:$0xff]
    %v720 = vld [vmem:[#allocation7 + $0xe8] sm:$0xff]
    %v721 = vld [vmem:[#allocation7 + $0xf0] sm:$0xff]
    %v722 = vld [vmem:[#allocation7 + $0xf8] sm:$0xff]
    %v723 = vld [vmem:[#allocation7 + $0x100] sm:$0xff]
    %v724 = vld [vmem:[#allocation7 + $0x108] sm:$0xff]
    %v725 = vld [vmem:[#allocation7 + $0x110] sm:$0xff]
    %v726 = vld [vmem:[#allocation7 + $0x118] sm:$0xff]
    %vm727 = vcmask 261120
    %v729 = vsel %vm727, %v690, 0
    %731 = vmatprep.subr.mxu0 0.0
    %732 = vmatpush1.msra.mxu0 %v691
    %733 = vmatprep.subr.mxu0 0.0
    %734 = vmatpush1.msra.mxu0 %v692
    %735 = vmatprep.subr.mxu0 0.0
    %736 = vmatpush1.msra.mxu0 %v693
    %737 = vmatprep.subr.mxu0 0.0
    %738 = vmatpush1.msra.mxu0 %v694
    %739 = vmatprep.subr.mxu0 0.0
    %740 = vmatpush1.msra.mxu0 %v695
    %741 = vmatprep.subr.mxu0 0.0
    %742 = vmatpush1.msra.mxu0 %v696
    %743 = vmatprep.subr.mxu0 0.0
    %744 = vmatpush1.msra.mxu0 %v697
    %745 = vmatprep.subr.mxu0 0.0
    %746 = vmatpush1.msra.mxu0 %v698
    %747 = vmatprep.subr.mxu0 0.0
    %748 = vmatpush1.msra.mxu0 %v699
    %749 = vmatprep.subr.mxu0 0.0
    %750 = vmatpush1.msra.mxu0 %v700
    %751 = vmatprep.subr.mxu0 0.0
    %752 = vmatpush1.msra.mxu0 %v701
    %753 = vmatprep.subr.mxu0 0.0
    %754 = vmatpush1.msra.mxu0 %v702
    %755 = vmatprep.subr.mxu0 0.0
    %756 = vmatpush1.msra.mxu0 %v703
    %757 = vmatprep.subr.mxu0 0.0
    %758 = vmatpush1.msra.mxu0 %v704
    %759 = vmatprep.subr.mxu0 0.0
    %760 = vmatpush1.msra.mxu0 %v705
    %761 = vmatprep.subr.mxu0 0.0
    %762 = vmatpush1.msra.mxu0 %v706
    %763 = vmatprep.subr.mxu0 0.0
    %764 = vmatpush1.msra.mxu0 %v707
    %765 = vmatprep.subr.mxu0 0.0
    %766 = vmatpush1.msra.mxu0 %v708
    %767 = vmatprep.subr.mxu0 0.0
    %768 = vmatpush1.msra.mxu0 %v709
    %769 = vmatprep.subr.mxu0 0.0
    %770 = vmatpush1.msra.mxu0 %v710
    %771 = vmatprep.subr.mxu0 0.0
    %772 = vmatpush1.msra.mxu0 %v711
    %773 = vmatprep.subr.mxu0 0.0
    %774 = vmatpush1.msra.mxu0 %v712
    %775 = vmatprep.subr.mxu0 0.0
    %776 = vmatpush1.msra.mxu0 %v713
    %777 = vmatprep.subr.mxu0 0.0
    %778 = vmatpush1.msra.mxu0 %v714
    %779 = vmatprep.subr.mxu0 0.0
    %780 = vmatpush1.msra.mxu0 %v715
    %781 = vmatprep.subr.mxu0 0.0
    %782 = vmatpush1.msra.mxu0 %v716
    %783 = vmatprep.subr.mxu0 0.0
    %784 = vmatpush1.msra.mxu0 %v717
    %785 = vmatprep.subr.mxu0 0.0
    %786 = vmatpush1.msra.mxu0 %v718
    %787 = vmatprep.subr.mxu0 0.0
    %788 = vmatpush1.msra.mxu0 %v719
    %789 = vmatprep.subr.mxu0 0.0
    %790 = vmatpush1.msra.mxu0 %v720
    %791 = vmatprep.subr.mxu0 0.0
    %792 = vmatpush1.msra.mxu0 %v721
    %793 = vmatprep.subr.mxu0 0.0
    %794 = vmatpush1.msra.mxu0 %v722
    %795 = vmatprep.mubr.f32.mxu0 %v689
    %796 = vmatmul.mubr.f32.gmra.mrb[0].mxu0 %v688
    %v797 = vpop.f32.mrb[0].mxu0
    %v798 = vadd.f32 0.0, %v797
    %v799 = vpop.f32.mrb[0].mxu0
    %800 = vdwg.mxu0
    %801 = vmatprep.subr.mxu0 0.0
    %802 = vmatpush1.msra.mxu0 %v723
    %803 = vmatprep.subr.mxu0 0.0
    %804 = vmatpush1.msra.mxu0 %v724
    %805 = vmatprep.subr.mxu0 0.0
    %806 = vmatpush1.msra.mxu0 %v725
    %807 = vmatprep.subr.mxu0 0.0
    %808 = vmatpush1.msra.mxu0 %v726
    %809 = vmatprep.subr.mxu0 0.0
    %810 = vmatpush1.msra.mxu0 0.0
    %811 = vmatprep.subr.mxu0 0.0
    %812 = vmatpush1.msra.mxu0 0.0
    %813 = vmatprep.subr.mxu0 0.0
    %814 = vmatpush1.msra.mxu0 0.0
    %815 = vmatprep.subr.mxu0 0.0
    %816 = vmatpush1.msra.mxu0 0.0
    %817 = vmatprep.subr.mxu0 0.0
    %818 = vmatpush1.msra.mxu0 0.0
    %819 = vmatprep.subr.mxu0 0.0
    %820 = vmatpush1.msra.mxu0 0.0
    %821 = vmatprep.subr.mxu0 0.0
    %822 = vmatpush1.msra.mxu0 0.0
    %823 = vmatprep.subr.mxu0 0.0
    %824 = vmatpush1.msra.mxu0 0.0
    %825 = vmatprep.subr.mxu0 0.0
    %826 = vmatpush1.msra.mxu0 0.0
    %827 = vmatprep.subr.mxu0 0.0
    %828 = vmatpush1.msra.mxu0 0.0
    %829 = vmatprep.subr.mxu0 0.0
    %830 = vmatpush1.msra.mxu0 0.0
    %831 = vmatprep.subr.mxu0 0.0
    %832 = vmatpush1.msra.mxu0 0.0
    %833 = vmatprep.subr.mxu0 0.0
    %834 = vmatpush1.msra.mxu0 0.0
    %835 = vmatprep.subr.mxu0 0.0
    %836 = vmatpush1.msra.mxu0 0.0
    %837 = vmatprep.subr.mxu0 0.0
    %838 = vmatpush1.msra.mxu0 0.0
    %839 = vmatprep.subr.mxu0 0.0
    %840 = vmatpush1.msra.mxu0 0.0
    %841 = vmatprep.subr.mxu0 0.0
    %842 = vmatpush1.msra.mxu0 0.0
    %843 = vmatprep.subr.mxu0 0.0
    %844 = vmatpush1.msra.mxu0 0.0
    %845 = vmatprep.subr.mxu0 0.0
    %846 = vmatpush1.msra.mxu0 0.0
    %847 = vmatprep.subr.mxu0 0.0
    %848 = vmatpush1.msra.mxu0 0.0
    %849 = vmatprep.subr.mxu0 0.0
    %850 = vmatpush1.msra.mxu0 0.0
    %851 = vmatprep.subr.mxu0 0.0
    %852 = vmatpush1.msra.mxu0 0.0
    %853 = vmatprep.subr.mxu0 0.0
    %854 = vmatpush1.msra.mxu0 0.0
    %855 = vmatprep.subr.mxu0 0.0
    %856 = vmatpush1.msra.mxu0 0.0
    %857 = vmatprep.subr.mxu0 0.0
    %858 = vmatpush1.msra.mxu0 0.0
    %859 = vmatprep.subr.mxu0 0.0
    %860 = vmatpush1.msra.mxu0 0.0
    %861 = vmatprep.subr.mxu0 0.0
    %862 = vmatpush1.msra.mxu0 0.0
    %863 = vmatprep.subr.mxu0 0.0
    %864 = vmatpush1.msra.mxu0 0.0
    %865 = vmatprep.mubr.f32.mxu0 0.0
    %866 = vmatmul.mubr.f32.gmra.mrb[0].mxu0 %v729
    %v867 = vpop.f32.mrb[0].mxu0
    %v868 = vadd.f32 %v798, %v867
    %v869 = vpop.f32.mrb[0].mxu0
    %870 = vdwg.mxu0
    %871 = vst.msk [vmem:[%s5] sm:$0xff] %vm727, %v868
    // Predicated region
    $region38: #{_lambda_.1} parent=1 // pred_check
      _
    $region39: #{_lambda_.1} parent=1 // pred_check_branch
      %873 = sbr.rel (0) target = $region41
    $region40: #{_lambda_.1} parent=1 // pred_region
      _
    $region41: #{_lambda_.1} parent=1 // pred_fallthru
      _
    // Predicated region
    $region42: #{_lambda_.1} parent=1 // pred_check
      _
    $region43: #{_lambda_.1} parent=1 // pred_check_branch
      %875 = sbr.rel (0) target = $region45
    $region44: #{_lambda_.1} parent=1 // pred_region
      _
    $region45: #{_lambda_.1} parent=1 // pred_fallthru
      _
    %876 = vsyncpa [#allocation3], 1
    %877 = vsyncpa [#allocation5], 1
    %878 = vsyncpa [#allocation8], 1

</llo_original>
